<compile_context>
chip_gen: v5e
topology: v5e:2x2
jax: 0.10.0
libtpu: 0.0.40
codegen_flags: <defaults>
</compile_context>

<pallas_src>
import functools

import jax
import jax.numpy as jnp
from jax.experimental import pallas as pl
from jax.experimental.pallas import tpu as pltpu

VOCAB = 32000
DIM = 4096

_NSEM = 32          # max in-flight row DMAs (MLP depth). Power of two.
                    # Sweep 16/32/64: v7x (higher HBM BW) may prefer 64,
                    # v5e is fine at 16-32.
_UNROLL = 8         # rows issued per steady-state loop iteration.
_DEFAULT_TB = 256   # tokens per grid step: 256*4096*4B = 4 MiB tile (8 MiB
                    # double-buffered) -> fits every generation's default
                    # scoped VMEM.  On v6e, passing block_tokens=512..1024 is
                    # profitable; the wrapper raises vmem_limit_bytes for that.


def _emb_gather_kernel(ids_ref, table_ref, out_ref, sem_ref, *, tb, nsem, unroll):
    """Gather `tb` embedding rows (ids in SMEM) from the HBM table into the out tile."""
    base = pl.program_id(0) * tb

    def issue(tok, r):
        pltpu.make_async_copy(
            table_ref.at[pl.ds(tok, 1), :],
            out_ref.at[pl.ds(r, 1), :],
            sem_ref.at[r % nsem],
        ).start()

    def wait(r):
        # Shape-matched dummy source: .wait() keys off the semaphore and the
        # (1, DIM) transfer size, which matches every issued copy exactly.
        pltpu.make_async_copy(
            table_ref.at[pl.ds(0, 1), :],
            out_ref.at[pl.ds(r, 1), :],
            sem_ref.at[r % nsem],
        ).wait()

    # --- Prologue: fill the semaphore ring, no waits (nsem <= 32 -> static). ---
    for r in range(nsem):
        issue(ids_ref[base + r], r)

    # --- Steady state: `unroll` rows per iteration.  For each chunk, hoist all
    # SMEM id reads above the waits, then wait the slot's old DMA and reissue. ---
    n_chunks = (tb - nsem) // unroll
    if n_chunks > 0:

        @pl.loop(0, n_chunks)
        def _(c):
            rbase = nsem + c * unroll
            toks = [ids_ref[base + rbase + u] for u in range(unroll)]
            for u in range(unroll):
                r = rbase + u
                wait(r - nsem)      # same slot as r (r - nsem ≡ r mod nsem)
                issue(toks[u], r)

    # --- Drain the last nsem in-flight rows (static unroll). ---
    for r in range(tb - nsem, tb):
        wait(r)


def _round_up(x, m):
    return -(-x // m) * m


def embedding_lookup(token_ids_flat, table, *, block_tokens=_DEFAULT_TB):
    """token_ids_flat: (T,) integer ids; table: (vocab, dim). Returns (T, dim)."""
    num_tokens = int(token_ids_flat.shape[0])
    vocab, dim = table.shape

    # Requested block, sublane-dense (multiple of 8 rows for f32).
    t_round8 = _round_up(max(num_tokens, 1), 8)
    tb_req = max(8, min(_round_up(int(block_tokens), 8), t_round8))

    # Balance the block size over the grid (less wasted gather in the ragged
    # last block) and force >=2 grid steps when possible so both v7x
    # TensorCores get blocks from the "parallel" axis.
    n_blocks = -(-t_round8 // tb_req)
    if t_round8 >= 16:
        n_blocks = max(n_blocks, 2)
    tb = _round_up(-(-t_round8 // n_blocks), 8)
    grid = -(-num_tokens // tb)
    t_pad = grid * tb

    # Semaphore-ring depth: power of two (so r % nsem lowers to AND), <= tb.
    nsem = min(_NSEM, tb)
    nsem = 1 << (nsem.bit_length() - 1)
    unroll = min(_UNROLL, nsem)

    # Clamp ids so a bad id can never trigger an out-of-range HBM DMA; pad only
    # the (tiny) id vector — the output keeps its exact shape, so there is no
    # post-kernel slice copy. Padded rows gather row 0 and are dropped by the
    # masked writeback of the partial last block.
    # TODO(synk): for very long token streams, feed ids as a blocked SMEM input
    # instead of scalar-prefetching the whole vector (avoids SMEM pressure).
    ids = jnp.clip(token_ids_flat.astype(jnp.int32), 0, vocab - 1)
    if t_pad != num_tokens:
        ids = jnp.pad(ids, (0, t_pad - num_tokens))

    grid_spec = pltpu.PrefetchScalarGridSpec(
        num_scalar_prefetch=1,                            # token ids land in SMEM
        grid=(grid,),
        in_specs=[pl.BlockSpec(memory_space=pl.ANY)],     # table stays in HBM
        out_specs=pl.BlockSpec((tb, dim), lambda i, ids: (i, 0)),
        scratch_shapes=[pltpu.SemaphoreType.DMA((nsem,))],
    )

    # Raise the scoped-VMEM limit only when a large tb needs it (e.g. v6e with
    # block_tokens=512..1024); default tb=256 fits every generation's default.
    itemsize = jnp.dtype(table.dtype).itemsize
    tile_bytes = tb * dim * itemsize
    vmem_limit = 2 * tile_bytes + (8 << 20) if 2 * tile_bytes > (24 << 20) else None

    # Purely memory-bound: T rows read + T rows written + ids.
    bytes_accessed = int(2 * num_tokens * dim * itemsize + 4 * t_pad)

    out = pl.pallas_call(
        functools.partial(_emb_gather_kernel, tb=tb, nsem=nsem, unroll=unroll),
        out_shape=jax.ShapeDtypeStruct((num_tokens, dim), table.dtype),
        grid_spec=grid_spec,
        compiler_params=pltpu.CompilerParams(
            dimension_semantics=("parallel",),   # tokens independent; megacore on v7x
            vmem_limit_bytes=vmem_limit,
        ),
        cost_estimate=pl.CostEstimate(
            flops=0, transcendentals=0, bytes_accessed=bytes_accessed),
    )(ids, table)

    return out


def emb_forward(x, table, *, block_tokens=_DEFAULT_TB):
    """x: integer token ids of any shape -> embeddings of shape x.shape + (dim,)."""
    orig_shape = x.shape
    flat = x.reshape(-1)
    out = embedding_lookup(flat, table, block_tokens=block_tokens)
    return out.reshape(*orig_shape, table.shape[1])


if __name__ == "__main__":
    key = jax.random.PRNGKey(0)
    k_table, k_ids1, k_ids2 = jax.random.split(key, 3)

    # Deterministic synthetic embedding table, same shape as nn.Embedding(32000, 4096).
    # TODO(synk): a bf16 table would halve HBM traffic once BW-bound, but the
    # reference nn.Embedding is float32, so keep f32 for exact semantics.
    table = jax.random.normal(k_table, (VOCAB, DIM), dtype=jnp.float32)

    # Test 1: small (batch=2, seq=8) -> tb=8, two grid steps (megacore path).
    x1 = jax.random.randint(k_ids1, (2, 8), minval=0, maxval=VOCAB, dtype=jnp.int32)
    out1 = jax.block_until_ready(emb_forward(x1, table))
    assert out1.shape == (2, 8, DIM), out1.shape
    assert jnp.array_equal(out1, table[x1]), "embedding gather mismatch (test 1)"

    # Test 2: multi-step grid with a ragged last block (batch=2, seq=100, TB=64
    # -> balanced tb=56, grid=4, exact-shape output, no post-kernel slice).
    x2 = jax.random.randint(k_ids2, (2, 100), minval=0, maxval=VOCAB, dtype=jnp.int32)
    out2 = jax.block_until_ready(emb_forward(x2, table, block_tokens=64))
    assert out2.shape == (2, 100, DIM), out2.shape
    assert jnp.array_equal(out2, table[x2]), "embedding gather mismatch (test 2)"

    print("KERNEL_OK")
</pallas_src>

<mosaic_0001>
module attributes {stable_mosaic.version = 11 : i64} {
  func.func @_emb_gather_kernel(%arg0: i32, %arg1: memref<16xi32, #tpu.memory_space<smem>>, %arg2: memref<32000x4096xf32, #tpu.memory_space<any>>, %arg3: memref<8x4096xf32, #tpu.memory_space<vmem>>, %arg4: memref<8x!tpu.dma_semaphore, #tpu.memory_space<semaphore_mem>>) attributes {dimension_semantics = [#tpu.dimension_semantics<parallel>], iteration_bounds = array<i64: 2>, scalar_prefetch = 1 : i64, scratch_operands = 1 : i64, tpu.core_type = #tpu.core_type<tc>, window_params = [{}, {transform_indices = @transform_1, window_bounds = array<i64: 8, 4096>}]} {
    %c8_i32 = arith.constant 8 : i32
    %0 = arith.muli %arg0, %c8_i32 : i32
    %c0_i32 = arith.constant 0 : i32
    %1 = arith.addi %0, %c0_i32 : i32
    %2 = arith.index_cast %1 : i32 to index
    %3 = memref.load %arg1[%2] : memref<16xi32, #tpu.memory_space<smem>>
    %c0_i32_0 = arith.constant 0 : i32
    %c0_i32_1 = arith.constant 0 : i32
    %4 = tpu.memref_slice %arg2[%3, %c0_i32_1] : memref<32000x4096xf32, #tpu.memory_space<any>> -> memref<1x4096xf32, #tpu.memory_space<any>>
    %c0_i32_2 = arith.constant 0 : i32
    %c0_i32_3 = arith.constant 0 : i32
    %5 = tpu.memref_slice %arg3[%c0_i32_2, %c0_i32_3] : memref<8x4096xf32, #tpu.memory_space<vmem>> -> memref<1x4096xf32, #tpu.memory_space<vmem>>
    %6 = tpu.memref_slice %arg4[%c0_i32_0] : memref<8x!tpu.dma_semaphore, #tpu.memory_space<semaphore_mem>> -> memref<1x!tpu.dma_semaphore, #tpu.memory_space<semaphore_mem>>
    %7 = tpu.memref_squeeze %6 : memref<1x!tpu.dma_semaphore, #tpu.memory_space<semaphore_mem>> -> memref<!tpu.dma_semaphore, #tpu.memory_space<semaphore_mem>>
    tpu.enqueue_dma source(%4 : memref<1x4096xf32, #tpu.memory_space<any>>) target(%5 : memref<1x4096xf32, #tpu.memory_space<vmem>>) target_semaphore(%7 : memref<!tpu.dma_semaphore, #tpu.memory_space<semaphore_mem>>)
    %c1_i32 = arith.constant 1 : i32
    %8 = arith.addi %0, %c1_i32 : i32
    %9 = arith.index_cast %8 : i32 to index
    %10 = memref.load %arg1[%9] : memref<16xi32, #tpu.memory_space<smem>>
    %c1_i32_4 = arith.constant 1 : i32
    %c0_i32_5 = arith.constant 0 : i32
    %11 = tpu.memref_slice %arg2[%10, %c0_i32_5] : memref<32000x4096xf32, #tpu.memory_space<any>> -> memref<1x4096xf32, #tpu.memory_space<any>>
    %c1_i32_6 = arith.constant 1 : i32
    %c0_i32_7 = arith.constant 0 : i32
    %12 = tpu.memref_slice %arg3[%c1_i32_6, %c0_i32_7] : memref<8x4096xf32, #tpu.memory_space<vmem>> -> memref<1x4096xf32, #tpu.memory_space<vmem>>
    %13 = tpu.memref_slice %arg4[%c1_i32_4] : memref<8x!tpu.dma_semaphore, #tpu.memory_space<semaphore_mem>> -> memref<1x!tpu.dma_semaphore, #tpu.memory_space<semaphore_mem>>
    %14 = tpu.memref_squeeze %13 : memref<1x!tpu.dma_semaphore, #tpu.memory_space<semaphore_mem>> -> memref<!tpu.dma_semaphore, #tpu.memory_space<semaphore_mem>>
    tpu.enqueue_dma source(%11 : memref<1x4096xf32, #tpu.memory_space<any>>) target(%12 : memref<1x4096xf32, #tpu.memory_space<vmem>>) target_semaphore(%14 : memref<!tpu.dma_semaphore, #tpu.memory_space<semaphore_mem>>)
    %c2_i32 = arith.constant 2 : i32
    %15 = arith.addi %0, %c2_i32 : i32
    %16 = arith.index_cast %15 : i32 to index
    %17 = memref.load %arg1[%16] : memref<16xi32, #tpu.memory_space<smem>>
    %c2_i32_8 = arith.constant 2 : i32
    %c0_i32_9 = arith.constant 0 : i32
    %18 = tpu.memref_slice %arg2[%17, %c0_i32_9] : memref<32000x4096xf32, #tpu.memory_space<any>> -> memref<1x4096xf32, #tpu.memory_space<any>>
    %c2_i32_10 = arith.constant 2 : i32
    %c0_i32_11 = arith.constant 0 : i32
    %19 = tpu.memref_slice %arg3[%c2_i32_10, %c0_i32_11] : memref<8x4096xf32, #tpu.memory_space<vmem>> -> memref<1x4096xf32, #tpu.memory_space<vmem>>
    %20 = tpu.memref_slice %arg4[%c2_i32_8] : memref<8x!tpu.dma_semaphore, #tpu.memory_space<semaphore_mem>> -> memref<1x!tpu.dma_semaphore, #tpu.memory_space<semaphore_mem>>
    %21 = tpu.memref_squeeze %20 : memref<1x!tpu.dma_semaphore, #tpu.memory_space<semaphore_mem>> -> memref<!tpu.dma_semaphore, #tpu.memory_space<semaphore_mem>>
    tpu.enqueue_dma source(%18 : memref<1x4096xf32, #tpu.memory_space<any>>) target(%19 : memref<1x4096xf32, #tpu.memory_space<vmem>>) target_semaphore(%21 : memref<!tpu.dma_semaphore, #tpu.memory_space<semaphore_mem>>)
    %c3_i32 = arith.constant 3 : i32
    %22 = arith.addi %0, %c3_i32 : i32
    %23 = arith.index_cast %22 : i32 to index
    %24 = memref.load %arg1[%23] : memref<16xi32, #tpu.memory_space<smem>>
    %c3_i32_12 = arith.constant 3 : i32
    %c0_i32_13 = arith.constant 0 : i32
    %25 = tpu.memref_slice %arg2[%24, %c0_i32_13] : memref<32000x4096xf32, #tpu.memory_space<any>> -> memref<1x4096xf32, #tpu.memory_space<any>>
    %c3_i32_14 = arith.constant 3 : i32
    %c0_i32_15 = arith.constant 0 : i32
    %26 = tpu.memref_slice %arg3[%c3_i32_14, %c0_i32_15] : memref<8x4096xf32, #tpu.memory_space<vmem>> -> memref<1x4096xf32, #tpu.memory_space<vmem>>
    %27 = tpu.memref_slice %arg4[%c3_i32_12] : memref<8x!tpu.dma_semaphore, #tpu.memory_space<semaphore_mem>> -> memref<1x!tpu.dma_semaphore, #tpu.memory_space<semaphore_mem>>
    %28 = tpu.memref_squeeze %27 : memref<1x!tpu.dma_semaphore, #tpu.memory_space<semaphore_mem>> -> memref<!tpu.dma_semaphore, #tpu.memory_space<semaphore_mem>>
    tpu.enqueue_dma source(%25 : memref<1x4096xf32, #tpu.memory_space<any>>) target(%26 : memref<1x4096xf32, #tpu.memory_space<vmem>>) target_semaphore(%28 : memref<!tpu.dma_semaphore, #tpu.memory_space<semaphore_mem>>)
    %c4_i32 = arith.constant 4 : i32
    %29 = arith.addi %0, %c4_i32 : i32
    %30 = arith.index_cast %29 : i32 to index
    %31 = memref.load %arg1[%30] : memref<16xi32, #tpu.memory_space<smem>>
    %c4_i32_16 = arith.constant 4 : i32
    %c0_i32_17 = arith.constant 0 : i32
    %32 = tpu.memref_slice %arg2[%31, %c0_i32_17] : memref<32000x4096xf32, #tpu.memory_space<any>> -> memref<1x4096xf32, #tpu.memory_space<any>>
    %c4_i32_18 = arith.constant 4 : i32
    %c0_i32_19 = arith.constant 0 : i32
    %33 = tpu.memref_slice %arg3[%c4_i32_18, %c0_i32_19] : memref<8x4096xf32, #tpu.memory_space<vmem>> -> memref<1x4096xf32, #tpu.memory_space<vmem>>
    %34 = tpu.memref_slice %arg4[%c4_i32_16] : memref<8x!tpu.dma_semaphore, #tpu.memory_space<semaphore_mem>> -> memref<1x!tpu.dma_semaphore, #tpu.memory_space<semaphore_mem>>
    %35 = tpu.memref_squeeze %34 : memref<1x!tpu.dma_semaphore, #tpu.memory_space<semaphore_mem>> -> memref<!tpu.dma_semaphore, #tpu.memory_space<semaphore_mem>>
    tpu.enqueue_dma source(%32 : memref<1x4096xf32, #tpu.memory_space<any>>) target(%33 : memref<1x4096xf32, #tpu.memory_space<vmem>>) target_semaphore(%35 : memref<!tpu.dma_semaphore, #tpu.memory_space<semaphore_mem>>)
    %c5_i32 = arith.constant 5 : i32
    %36 = arith.addi %0, %c5_i32 : i32
    %37 = arith.index_cast %36 : i32 to index
    %38 = memref.load %arg1[%37] : memref<16xi32, #tpu.memory_space<smem>>
    %c5_i32_20 = arith.constant 5 : i32
    %c0_i32_21 = arith.constant 0 : i32
    %39 = tpu.memref_slice %arg2[%38, %c0_i32_21] : memref<32000x4096xf32, #tpu.memory_space<any>> -> memref<1x4096xf32, #tpu.memory_space<any>>
    %c5_i32_22 = arith.constant 5 : i32
    %c0_i32_23 = arith.constant 0 : i32
    %40 = tpu.memref_slice %arg3[%c5_i32_22, %c0_i32_23] : memref<8x4096xf32, #tpu.memory_space<vmem>> -> memref<1x4096xf32, #tpu.memory_space<vmem>>
    %41 = tpu.memref_slice %arg4[%c5_i32_20] : memref<8x!tpu.dma_semaphore, #tpu.memory_space<semaphore_mem>> -> memref<1x!tpu.dma_semaphore, #tpu.memory_space<semaphore_mem>>
    %42 = tpu.memref_squeeze %41 : memref<1x!tpu.dma_semaphore, #tpu.memory_space<semaphore_mem>> -> memref<!tpu.dma_semaphore, #tpu.memory_space<semaphore_mem>>
    tpu.enqueue_dma source(%39 : memref<1x4096xf32, #tpu.memory_space<any>>) target(%40 : memref<1x4096xf32, #tpu.memory_space<vmem>>) target_semaphore(%42 : memref<!tpu.dma_semaphore, #tpu.memory_space<semaphore_mem>>)
    %c6_i32 = arith.constant 6 : i32
    %43 = arith.addi %0, %c6_i32 : i32
    %44 = arith.index_cast %43 : i32 to index
    %45 = memref.load %arg1[%44] : memref<16xi32, #tpu.memory_space<smem>>
    %c6_i32_24 = arith.constant 6 : i32
    %c0_i32_25 = arith.constant 0 : i32
    %46 = tpu.memref_slice %arg2[%45, %c0_i32_25] : memref<32000x4096xf32, #tpu.memory_space<any>> -> memref<1x4096xf32, #tpu.memory_space<any>>
    %c6_i32_26 = arith.constant 6 : i32
    %c0_i32_27 = arith.constant 0 : i32
    %47 = tpu.memref_slice %arg3[%c6_i32_26, %c0_i32_27] : memref<8x4096xf32, #tpu.memory_space<vmem>> -> memref<1x4096xf32, #tpu.memory_space<vmem>>
    %48 = tpu.memref_slice %arg4[%c6_i32_24] : memref<8x!tpu.dma_semaphore, #tpu.memory_space<semaphore_mem>> -> memref<1x!tpu.dma_semaphore, #tpu.memory_space<semaphore_mem>>
    %49 = tpu.memref_squeeze %48 : memref<1x!tpu.dma_semaphore, #tpu.memory_space<semaphore_mem>> -> memref<!tpu.dma_semaphore, #tpu.memory_space<semaphore_mem>>
    tpu.enqueue_dma source(%46 : memref<1x4096xf32, #tpu.memory_space<any>>) target(%47 : memref<1x4096xf32, #tpu.memory_space<vmem>>) target_semaphore(%49 : memref<!tpu.dma_semaphore, #tpu.memory_space<semaphore_mem>>)
    %c7_i32 = arith.constant 7 : i32
    %50 = arith.addi %0, %c7_i32 : i32
    %51 = arith.index_cast %50 : i32 to index
    %52 = memref.load %arg1[%51] : memref<16xi32, #tpu.memory_space<smem>>
    %c7_i32_28 = arith.constant 7 : i32
    %c0_i32_29 = arith.constant 0 : i32
    %53 = tpu.memref_slice %arg2[%52, %c0_i32_29] : memref<32000x4096xf32, #tpu.memory_space<any>> -> memref<1x4096xf32, #tpu.memory_space<any>>
    %c7_i32_30 = arith.constant 7 : i32
    %c0_i32_31 = arith.constant 0 : i32
    %54 = tpu.memref_slice %arg3[%c7_i32_30, %c0_i32_31] : memref<8x4096xf32, #tpu.memory_space<vmem>> -> memref<1x4096xf32, #tpu.memory_space<vmem>>
    %55 = tpu.memref_slice %arg4[%c7_i32_28] : memref<8x!tpu.dma_semaphore, #tpu.memory_space<semaphore_mem>> -> memref<1x!tpu.dma_semaphore, #tpu.memory_space<semaphore_mem>>
    %56 = tpu.memref_squeeze %55 : memref<1x!tpu.dma_semaphore, #tpu.memory_space<semaphore_mem>> -> memref<!tpu.dma_semaphore, #tpu.memory_space<semaphore_mem>>
    tpu.enqueue_dma source(%53 : memref<1x4096xf32, #tpu.memory_space<any>>) target(%54 : memref<1x4096xf32, #tpu.memory_space<vmem>>) target_semaphore(%56 : memref<!tpu.dma_semaphore, #tpu.memory_space<semaphore_mem>>)
    %c0_i32_32 = arith.constant 0 : i32
    %c0_i32_33 = arith.constant 0 : i32
    %c0_i32_34 = arith.constant 0 : i32
    %57 = tpu.memref_slice %arg2[%c0_i32_33, %c0_i32_34] : memref<32000x4096xf32, #tpu.memory_space<any>> -> memref<1x4096xf32, #tpu.memory_space<any>>
    %c0_i32_35 = arith.constant 0 : i32
    %c0_i32_36 = arith.constant 0 : i32
    %58 = tpu.memref_slice %arg3[%c0_i32_35, %c0_i32_36] : memref<8x4096xf32, #tpu.memory_space<vmem>> -> memref<1x4096xf32, #tpu.memory_space<vmem>>
    %59 = tpu.memref_slice %arg4[%c0_i32_32] : memref<8x!tpu.dma_semaphore, #tpu.memory_space<semaphore_mem>> -> memref<1x!tpu.dma_semaphore, #tpu.memory_space<semaphore_mem>>
    %60 = tpu.memref_squeeze %59 : memref<1x!tpu.dma_semaphore, #tpu.memory_space<semaphore_mem>> -> memref<!tpu.dma_semaphore, #tpu.memory_space<semaphore_mem>>
    tpu.wait_dma2 semaphore(%60 : memref<!tpu.dma_semaphore, #tpu.memory_space<semaphore_mem>>) src(%57 : memref<1x4096xf32, #tpu.memory_space<any>>) dst(%58 : memref<1x4096xf32, #tpu.memory_space<vmem>>)
    %c1_i32_37 = arith.constant 1 : i32
    %c0_i32_38 = arith.constant 0 : i32
    %c0_i32_39 = arith.constant 0 : i32
    %61 = tpu.memref_slice %arg2[%c0_i32_38, %c0_i32_39] : memref<32000x4096xf32, #tpu.memory_space<any>> -> memref<1x4096xf32, #tpu.memory_space<any>>
    %c1_i32_40 = arith.constant 1 : i32
    %c0_i32_41 = arith.constant 0 : i32
    %62 = tpu.memref_slice %arg3[%c1_i32_40, %c0_i32_41] : memref<8x4096xf32, #tpu.memory_space<vmem>> -> memref<1x4096xf32, #tpu.memory_space<vmem>>
    %63 = tpu.memref_slice %arg4[%c1_i32_37] : memref<8x!tpu.dma_semaphore, #tpu.memory_space<semaphore_mem>> -> memref<1x!tpu.dma_semaphore, #tpu.memory_space<semaphore_mem>>
    %64 = tpu.memref_squeeze %63 : memref<1x!tpu.dma_semaphore, #tpu.memory_space<semaphore_mem>> -> memref<!tpu.dma_semaphore, #tpu.memory_space<semaphore_mem>>
    tpu.wait_dma2 semaphore(%64 : memref<!tpu.dma_semaphore, #tpu.memory_space<semaphore_mem>>) src(%61 : memref<1x4096xf32, #tpu.memory_space<any>>) dst(%62 : memref<1x4096xf32, #tpu.memory_space<vmem>>)
    %c2_i32_42 = arith.constant 2 : i32
    %c0_i32_43 = arith.constant 0 : i32
    %c0_i32_44 = arith.constant 0 : i32
    %65 = tpu.memref_slice %arg2[%c0_i32_43, %c0_i32_44] : memref<32000x4096xf32, #tpu.memory_space<any>> -> memref<1x4096xf32, #tpu.memory_space<any>>
    %c2_i32_45 = arith.constant 2 : i32
    %c0_i32_46 = arith.constant 0 : i32
    %66 = tpu.memref_slice %arg3[%c2_i32_45, %c0_i32_46] : memref<8x4096xf32, #tpu.memory_space<vmem>> -> memref<1x4096xf32, #tpu.memory_space<vmem>>
    %67 = tpu.memref_slice %arg4[%c2_i32_42] : memref<8x!tpu.dma_semaphore, #tpu.memory_space<semaphore_mem>> -> memref<1x!tpu.dma_semaphore, #tpu.memory_space<semaphore_mem>>
    %68 = tpu.memref_squeeze %67 : memref<1x!tpu.dma_semaphore, #tpu.memory_space<semaphore_mem>> -> memref<!tpu.dma_semaphore, #tpu.memory_space<semaphore_mem>>
    tpu.wait_dma2 semaphore(%68 : memref<!tpu.dma_semaphore, #tpu.memory_space<semaphore_mem>>) src(%65 : memref<1x4096xf32, #tpu.memory_space<any>>) dst(%66 : memref<1x4096xf32, #tpu.memory_space<vmem>>)
    %c3_i32_47 = arith.constant 3 : i32
    %c0_i32_48 = arith.constant 0 : i32
    %c0_i32_49 = arith.constant 0 : i32
    %69 = tpu.memref_slice %arg2[%c0_i32_48, %c0_i32_49] : memref<32000x4096xf32, #tpu.memory_space<any>> -> memref<1x4096xf32, #tpu.memory_space<any>>
    %c3_i32_50 = arith.constant 3 : i32
    %c0_i32_51 = arith.constant 0 : i32
    %70 = tpu.memref_slice %arg3[%c3_i32_50, %c0_i32_51] : memref<8x4096xf32, #tpu.memory_space<vmem>> -> memref<1x4096xf32, #tpu.memory_space<vmem>>
    %71 = tpu.memref_slice %arg4[%c3_i32_47] : memref<8x!tpu.dma_semaphore, #tpu.memory_space<semaphore_mem>> -> memref<1x!tpu.dma_semaphore, #tpu.memory_space<semaphore_mem>>
    %72 = tpu.memref_squeeze %71 : memref<1x!tpu.dma_semaphore, #tpu.memory_space<semaphore_mem>> -> memref<!tpu.dma_semaphore, #tpu.memory_space<semaphore_mem>>
    tpu.wait_dma2 semaphore(%72 : memref<!tpu.dma_semaphore, #tpu.memory_space<semaphore_mem>>) src(%69 : memref<1x4096xf32, #tpu.memory_space<any>>) dst(%70 : memref<1x4096xf32, #tpu.memory_space<vmem>>)
    %c4_i32_52 = arith.constant 4 : i32
    %c0_i32_53 = arith.constant 0 : i32
    %c0_i32_54 = arith.constant 0 : i32
    %73 = tpu.memref_slice %arg2[%c0_i32_53, %c0_i32_54] : memref<32000x4096xf32, #tpu.memory_space<any>> -> memref<1x4096xf32, #tpu.memory_space<any>>
    %c4_i32_55 = arith.constant 4 : i32
    %c0_i32_56 = arith.constant 0 : i32
    %74 = tpu.memref_slice %arg3[%c4_i32_55, %c0_i32_56] : memref<8x4096xf32, #tpu.memory_space<vmem>> -> memref<1x4096xf32, #tpu.memory_space<vmem>>
    %75 = tpu.memref_slice %arg4[%c4_i32_52] : memref<8x!tpu.dma_semaphore, #tpu.memory_space<semaphore_mem>> -> memref<1x!tpu.dma_semaphore, #tpu.memory_space<semaphore_mem>>
    %76 = tpu.memref_squeeze %75 : memref<1x!tpu.dma_semaphore, #tpu.memory_space<semaphore_mem>> -> memref<!tpu.dma_semaphore, #tpu.memory_space<semaphore_mem>>
    tpu.wait_dma2 semaphore(%76 : memref<!tpu.dma_semaphore, #tpu.memory_space<semaphore_mem>>) src(%73 : memref<1x4096xf32, #tpu.memory_space<any>>) dst(%74 : memref<1x4096xf32, #tpu.memory_space<vmem>>)
    %c5_i32_57 = arith.constant 5 : i32
    %c0_i32_58 = arith.constant 0 : i32
    %c0_i32_59 = arith.constant 0 : i32
    %77 = tpu.memref_slice %arg2[%c0_i32_58, %c0_i32_59] : memref<32000x4096xf32, #tpu.memory_space<any>> -> memref<1x4096xf32, #tpu.memory_space<any>>
    %c5_i32_60 = arith.constant 5 : i32
    %c0_i32_61 = arith.constant 0 : i32
    %78 = tpu.memref_slice %arg3[%c5_i32_60, %c0_i32_61] : memref<8x4096xf32, #tpu.memory_space<vmem>> -> memref<1x4096xf32, #tpu.memory_space<vmem>>
    %79 = tpu.memref_slice %arg4[%c5_i32_57] : memref<8x!tpu.dma_semaphore, #tpu.memory_space<semaphore_mem>> -> memref<1x!tpu.dma_semaphore, #tpu.memory_space<semaphore_mem>>
    %80 = tpu.memref_squeeze %79 : memref<1x!tpu.dma_semaphore, #tpu.memory_space<semaphore_mem>> -> memref<!tpu.dma_semaphore, #tpu.memory_space<semaphore_mem>>
    tpu.wait_dma2 semaphore(%80 : memref<!tpu.dma_semaphore, #tpu.memory_space<semaphore_mem>>) src(%77 : memref<1x4096xf32, #tpu.memory_space<any>>) dst(%78 : memref<1x4096xf32, #tpu.memory_space<vmem>>)
    %c6_i32_62 = arith.constant 6 : i32
    %c0_i32_63 = arith.constant 0 : i32
    %c0_i32_64 = arith.constant 0 : i32
    %81 = tpu.memref_slice %arg2[%c0_i32_63, %c0_i32_64] : memref<32000x4096xf32, #tpu.memory_space<any>> -> memref<1x4096xf32, #tpu.memory_space<any>>
    %c6_i32_65 = arith.constant 6 : i32
    %c0_i32_66 = arith.constant 0 : i32
    %82 = tpu.memref_slice %arg3[%c6_i32_65, %c0_i32_66] : memref<8x4096xf32, #tpu.memory_space<vmem>> -> memref<1x4096xf32, #tpu.memory_space<vmem>>
    %83 = tpu.memref_slice %arg4[%c6_i32_62] : memref<8x!tpu.dma_semaphore, #tpu.memory_space<semaphore_mem>> -> memref<1x!tpu.dma_semaphore, #tpu.memory_space<semaphore_mem>>
    %84 = tpu.memref_squeeze %83 : memref<1x!tpu.dma_semaphore, #tpu.memory_space<semaphore_mem>> -> memref<!tpu.dma_semaphore, #tpu.memory_space<semaphore_mem>>
    tpu.wait_dma2 semaphore(%84 : memref<!tpu.dma_semaphore, #tpu.memory_space<semaphore_mem>>) src(%81 : memref<1x4096xf32, #tpu.memory_space<any>>) dst(%82 : memref<1x4096xf32, #tpu.memory_space<vmem>>)
    %c7_i32_67 = arith.constant 7 : i32
    %c0_i32_68 = arith.constant 0 : i32
    %c0_i32_69 = arith.constant 0 : i32
    %85 = tpu.memref_slice %arg2[%c0_i32_68, %c0_i32_69] : memref<32000x4096xf32, #tpu.memory_space<any>> -> memref<1x4096xf32, #tpu.memory_space<any>>
    %c7_i32_70 = arith.constant 7 : i32
    %c0_i32_71 = arith.constant 0 : i32
    %86 = tpu.memref_slice %arg3[%c7_i32_70, %c0_i32_71] : memref<8x4096xf32, #tpu.memory_space<vmem>> -> memref<1x4096xf32, #tpu.memory_space<vmem>>
    %87 = tpu.memref_slice %arg4[%c7_i32_67] : memref<8x!tpu.dma_semaphore, #tpu.memory_space<semaphore_mem>> -> memref<1x!tpu.dma_semaphore, #tpu.memory_space<semaphore_mem>>
    %88 = tpu.memref_squeeze %87 : memref<1x!tpu.dma_semaphore, #tpu.memory_space<semaphore_mem>> -> memref<!tpu.dma_semaphore, #tpu.memory_space<semaphore_mem>>
    tpu.wait_dma2 semaphore(%88 : memref<!tpu.dma_semaphore, #tpu.memory_space<semaphore_mem>>) src(%85 : memref<1x4096xf32, #tpu.memory_space<any>>) dst(%86 : memref<1x4096xf32, #tpu.memory_space<vmem>>)
    return
  }
  func.func @transform_1(%arg0: i32, %arg1: memref<16xi32, #tpu.memory_space<smem>>) -> (i32, i32) {
    %c0_i32 = arith.constant 0 : i32
    %c0_i32_0 = arith.constant 0 : i32
    return %arg0, %c0_i32 : i32, i32
  }
}

</mosaic_0001>

<llo_original>
// kernel: tpu_custom_call.1
$region0: #{tpu_custom_call.1}
  #allocation0 [shape = 'u32[]', space=smem, size = 0x4, offset = 0x4, fixed_abs, tag = 'smem constant byte address 0x4 - core index']
  #allocation1 [shape = 'u32[72,128]{1,0:T(1,128)}', space=vmem, size = 0x9000, scoped, tag = 'internal scratch']
  #allocation2 [shape = 's32[8]{0}', space=sflag, size = 0x20, scoped, tag = 'scratch operand']
  #allocation3 [shape = 's32[1]{0}', space=sflag, size = 0x4, scoped, tag = 'scoped memory for tpu_custom_call.1']
  #allocation4 [shape = 'u8[512]{0}', space=smem, size = 0x200, scoped, tag = 'prefetched SMEM operand 0']
  #allocation7 [shape = 's32[]', space=sflag, size = 0x4, offset = 0, fixed_abs, tag = 'sflag constant byte address 0x0 - dummy sync flag']
  #allocation8 [shape = 's32[]', space=sflag, size = 0x4, offset = 0, fixed_abs, tag = 'sflag constant byte address 0x0 - dummy sync flag']
  #allocation9 [shape = 's32[]', space=sflag, size = 0x4, offset = 0, fixed_abs, tag = 'sflag constant byte address 0x0 - dummy sync flag']
  #allocation10 [shape = 's32[]', space=sflag, size = 0x4, offset = 0, fixed_abs, tag = 'sflag constant byte address 0x0 - dummy sync flag']
  #allocation11 [shape = 's32[]', space=sflag, size = 0x4, offset = 0, fixed_abs, tag = 'sflag constant byte address 0x0 - dummy sync flag']
  #allocation12 [shape = 's32[]', space=sflag, size = 0x4, offset = 0, fixed_abs, tag = 'sflag constant byte address 0x0 - dummy sync flag']
  #allocation13 [shape = 's32[]', space=sflag, size = 0x4, offset = 0, fixed_abs, tag = 'sflag constant byte address 0x0 - dummy sync flag']
  #allocation14 [shape = 's32[]', space=sflag, size = 0x4, offset = 0, fixed_abs, tag = 'sflag constant byte address 0x0 - dummy sync flag']
  %s0 = inlined_call_operand.hbm [shape: s32[16], index: 0, kind: input, shape index: {}]
  %s1 = inlined_call_operand.hbm [shape: f32[32000,4096], index: 1, kind: input, shape index: {}]
  %s2 = inlined_call_operand.hbm [shape: f32[16,4096], index: 2, kind: output, shape index: {}]
  %s3 = sld [smem:[#allocation0]]
  $region25: #{tpu_custom_call.1} parent=0
    _
  %s5 = ssub.s32 1, %s3
  %s6 = scalar_select 0, %s5, %s3
  %s8 = sshll.u32 %s0, 4
  %s9 = int_to_ptr.hbm [resolvable:$true] %s8
  %11 = dma.hbm_to_smem %s9, 16, [#allocation4], [#allocation3]
  %13 = dma.done [#allocation3], 16
  %14 = sfence
  $region1: #{tpu_custom_call.1} parent=0
    #allocation5 [shape = 'u8[262144]{0}', space=vmem, size = 0x40000, scoped, tag = 'output window, operand 0']
    #allocation6 [shape = 's32[2]{0}', space=sflag, size = 0x8, scoped, tag = 'scoped memory for tpu_custom_call.1']
    %15 = vsyncpa [#allocation6], 0
    %s16 = scalar_lea.sflag [#allocation6], 1
    %17 = vsyncpa %s16, 0
    loop: start=0, step=1, limit=3
    $region2: #{tpu_custom_call.1} parent=1 // loop_pre_header
      _
    $region3: #{tpu_custom_call.1} parent=1 // loop_header
      %s19 = sphi 0, %s23
      %p20 = scmp.ge.s32.totalorder %s19, 3
      %s28 = sphi 0, %s30
      %s31 = sphi 0, %s28
      %s41 = sphi 0, %s31
    $region4: #{tpu_custom_call.1} parent=1 // loop_header_branch
      %22 = sbr.rel (%p20) target = $region8
    $region5: #{tpu_custom_call.1} parent=1 // loop_body
      %s24 = ssub.s32 %s19, 1
      %s25 = sadd.s32 %s19, 1
      %s26 = ssub.s32 %s19, %s25
      %p27 = scmp.eq.s32.totalorder %s26, 0
      %s29 = sadd.s32 %s28, 1
      %s30 = scalar_select %p27, %s28, %s29
      %p32 = pneg %p27
      %p33 = scmp.eq.s32.totalorder %s19, 1
      %p34 = por %p32, %p33
      %p35 = scmp.ne.s32.totalorder %s28, %s31
      %p36 = scmp.eq.s32.totalorder %s19, 0
      %p37 = por %p35, %p36
      %p38 = scmp.ne.s32.totalorder %s28, %s31
      %p39 = scmp.eq.s32.totalorder %s24, 1
      %p40 = por %p38, %p39
      %p42 = scmp.ne.s32.totalorder %s31, %s41
      %p43 = scmp.eq.s32.totalorder %s24, 0
      %p44 = por %p42, %p43
      %p45 = scmp.lt.s32.totalorder %s19, 2
      // Predicated region
      $region9: #{tpu_custom_call.1} parent=5 // pred_check
        %p46 = pneg %p45
      $region10: #{tpu_custom_call.1} parent=5 // pred_check_branch
        %48 = sbr.rel (%p46) target = $region12
      $region11: #{tpu_custom_call.1} parent=5 // pred_region
        %p49 = pneg %p37
        %p50 = pneg %p34
        %s51 = sand.u32 %s28, 1
        %s52 = scalar_lea.sflag [#allocation6], %s51
        %s53 = sand.u32 %s28, 1
        %s54 = smul.addr %s53, 256
        %s55 = scalar_lea.vmem [#allocation5], %s54
        %s56 = smul.u32 %s19, 8
        %s57 = sld [smem:[#allocation4 + %s56]]
        %s58 = sshrl.u32 %s57, 3
        %s59 = sand.u32 %s57, 7
        %s60 = smul.u32 %s58, 256
        %s61 = sadd.s32 %s59, %s60
        %s62 = scalar_lea.hbm %s1, %s61
        %s63 = sshll.u32 %s62, 4
        %s64 = int_to_ptr.hbm [resolvable:$true] %s63
        %s65 = sshll.u32 %s55, 4
        %s66 = int_to_ptr.vmem [resolvable:$true] %s65
        %70 = dma.hbm_to_vmem [thread:$0]  %s64, 512, %s66, [#allocation2], 128, 128, 1
        %s71 = sadd.s32 %s56, 1
        %s72 = sld [smem:[#allocation4 + %s71]]
        %s73 = sshrl.u32 %s72, 3
        %s74 = sand.u32 %s72, 7
        %s75 = smul.u32 %s73, 256
        %s76 = sadd.s32 %s74, %s75
        %s77 = scalar_lea.hbm %s1, %s76
        %s78 = scalar_lea.vmem %s55, 1 [#allocation5]
        %s79 = scalar_lea.sflag [#allocation2], 1
        %s80 = sshll.u32 %s77, 4
        %s81 = int_to_ptr.hbm [resolvable:$true] %s80
        %s82 = sshll.u32 %s78, 4
        %s83 = int_to_ptr.vmem [resolvable:$true] %s82
        %87 = dma.hbm_to_vmem [thread:$0]  %s81, 512, %s83, %s79, 128, 128, 1
        %s88 = sadd.s32 %s56, 2
        %s89 = sld [smem:[#allocation4 + %s88]]
        %s90 = sshrl.u32 %s89, 3
        %s91 = sand.u32 %s89, 7
        %s92 = smul.u32 %s90, 256
        %s93 = sadd.s32 %s91, %s92
        %s94 = scalar_lea.hbm %s1, %s93
        %s95 = scalar_lea.vmem %s55, 2 [#allocation5]
        %s96 = scalar_lea.sflag [#allocation2], 2
        %s97 = sshll.u32 %s94, 4
        %s98 = int_to_ptr.hbm [resolvable:$true] %s97
        %s99 = sshll.u32 %s95, 4
        %s100 = int_to_ptr.vmem [resolvable:$true] %s99
        %104 = dma.hbm_to_vmem [thread:$0]  %s98, 512, %s100, %s96, 128, 128, 1
        %s105 = sadd.s32 %s56, 3
        %s106 = sld [smem:[#allocation4 + %s105]]
        %s107 = sshrl.u32 %s106, 3
        %s108 = sand.u32 %s106, 7
        %s109 = smul.u32 %s107, 256
        %s110 = sadd.s32 %s108, %s109
        %s111 = scalar_lea.hbm %s1, %s110
        %s112 = scalar_lea.vmem %s55, 3 [#allocation5]
        %s113 = scalar_lea.sflag [#allocation2], 3
        %s114 = sshll.u32 %s111, 4
        %s115 = int_to_ptr.hbm [resolvable:$true] %s114
        %s116 = sshll.u32 %s112, 4
        %s117 = int_to_ptr.vmem [resolvable:$true] %s116
        %121 = dma.hbm_to_vmem [thread:$0]  %s115, 512, %s117, %s113, 128, 128, 1
        %s122 = sadd.s32 %s56, 4
        %s123 = sld [smem:[#allocation4 + %s122]]
        %s124 = sshrl.u32 %s123, 3
        %s125 = sand.u32 %s123, 7
        %s126 = smul.u32 %s124, 256
        %s127 = sadd.s32 %s125, %s126
        %s128 = scalar_lea.hbm %s1, %s127
        %s129 = scalar_lea.vmem %s55, 4 [#allocation5]
        %s130 = scalar_lea.sflag [#allocation2], 4
        %s131 = sshll.u32 %s128, 4
        %s132 = int_to_ptr.hbm [resolvable:$true] %s131
        %s133 = sshll.u32 %s129, 4
        %s134 = int_to_ptr.vmem [resolvable:$true] %s133
        %138 = dma.hbm_to_vmem [thread:$0]  %s132, 512, %s134, %s130, 128, 128, 1
        %s139 = sadd.s32 %s56, 5
        %s140 = sld [smem:[#allocation4 + %s139]]
        %s141 = sshrl.u32 %s140, 3
        %s142 = sand.u32 %s140, 7
        %s143 = smul.u32 %s141, 256
        %s144 = sadd.s32 %s142, %s143
        %s145 = scalar_lea.hbm %s1, %s144
        %s146 = scalar_lea.vmem %s55, 5 [#allocation5]
        %s147 = scalar_lea.sflag [#allocation2], 5
        %s148 = sshll.u32 %s145, 4
        %s149 = int_to_ptr.hbm [resolvable:$true] %s148
        %s150 = sshll.u32 %s146, 4
        %s151 = int_to_ptr.vmem [resolvable:$true] %s150
        %155 = dma.hbm_to_vmem [thread:$0]  %s149, 512, %s151, %s147, 128, 128, 1
        %s156 = sadd.s32 %s56, 6
        %s157 = sld [smem:[#allocation4 + %s156]]
        %s158 = sshrl.u32 %s157, 3
        %s159 = sand.u32 %s157, 7
        %s160 = smul.u32 %s158, 256
        %s161 = sadd.s32 %s159, %s160
        %s162 = scalar_lea.hbm %s1, %s161
        %s163 = scalar_lea.vmem %s55, 6 [#allocation5]
        %s164 = scalar_lea.sflag [#allocation2], 6
        %s165 = sshll.u32 %s162, 4
        %s166 = int_to_ptr.hbm [resolvable:$true] %s165
        %s167 = sshll.u32 %s163, 4
        %s168 = int_to_ptr.vmem [resolvable:$true] %s167
        %172 = dma.hbm_to_vmem [thread:$0]  %s166, 512, %s168, %s164, 128, 128, 1
        %s173 = sadd.s32 %s56, 7
        %s174 = sld [smem:[#allocation4 + %s173]]
        %s175 = sshrl.u32 %s174, 3
        %s176 = sand.u32 %s174, 7
        %s177 = smul.u32 %s175, 256
        %s178 = sadd.s32 %s176, %s177
        %s179 = scalar_lea.hbm %s1, %s178
        %s180 = scalar_lea.vmem %s55, 7 [#allocation5]
        %s181 = scalar_lea.sflag [#allocation2], 7
        %s182 = sshll.u32 %s179, 4
        %s183 = int_to_ptr.hbm [resolvable:$true] %s182
        %s184 = sshll.u32 %s180, 4
        %s185 = int_to_ptr.vmem [resolvable:$true] %s184
        %189 = dma.hbm_to_vmem [thread:$0]  %s183, 512, %s185, %s181, 128, 128, 1
        %s190 = smul.u32 1, 32
        %s191 = sshll.u32 %s190, 4
        %192 = dma.done [#allocation2], %s191
        %s193 = sshll.u32 %s190, 4
        %194 = dma.done %s79, %s193
        %s195 = sshll.u32 %s190, 4
        %196 = dma.done %s96, %s195
        %s197 = sshll.u32 %s190, 4
        %198 = dma.done %s113, %s197
        %s199 = sshll.u32 %s190, 4
        %200 = dma.done %s130, %s199
        %s201 = sshll.u32 %s190, 4
        %202 = dma.done %s147, %s201
        %s203 = sshll.u32 %s190, 4
        %204 = dma.done %s164, %s203
        %s205 = sshll.u32 %s190, 4
        %206 = dma.done %s181, %s205
        %s207 = sand.u32 %s28, 1
        %s208 = scalar_lea.sflag [#allocation6], %s207
        %s209 = sand.u32 %s28, 1
        %s210 = smul.addr %s209, 256
        %s211 = scalar_lea.vmem [#allocation5], %s210
        // Predicated region
        $region13: #{tpu_custom_call.1} parent=11 // pred_check
          %p212 = pneg %p34
        $region14: #{tpu_custom_call.1} parent=11 // pred_check_branch
          %214 = sbr.rel (%p212) target = $region16
        $region15: #{tpu_custom_call.1} parent=11 // pred_region
          %216 = vsyncadd %s208, 0
          %s217 = smul.addr %s19, 32
          %s218 = smul.addr %s217, 8
          %s219 = scalar_lea.hbm %s2, %s218
          %s221 = sshll.u32 %s211, 4
          %s222 = int_to_ptr.vmem [resolvable:$true] %s221
          %s223 = sshll.u32 %s219, 4
          %s224 = int_to_ptr.hbm [resolvable:$true] %s223
          %226 = dma.vmem_to_hbm [thread:$0]  %s222, 4096, %s224, %s208
        $region16: #{tpu_custom_call.1} parent=11 // pred_fallthru
          _
      $region12: #{tpu_custom_call.1} parent=5 // pred_fallthru
        _
      %p227 = scmp.le.s32.totalorder 1, %s19
      // Predicated region
      $region17: #{tpu_custom_call.1} parent=5 // pred_check
        %p228 = pneg %p227
      $region18: #{tpu_custom_call.1} parent=5 // pred_check_branch
        %230 = sbr.rel (%p228) target = $region20
      $region19: #{tpu_custom_call.1} parent=5 // pred_region
        %s231 = ssub.s32 %s19, 1
        // Predicated region
        $region21: #{tpu_custom_call.1} parent=19 // pred_check
          %p232 = pneg %p40
        $region22: #{tpu_custom_call.1} parent=19 // pred_check_branch
          %234 = sbr.rel (%p232) target = $region24
        $region23: #{tpu_custom_call.1} parent=19 // pred_region
          %s235 = sand.u32 %s31, 1
          %s236 = scalar_lea.sflag [#allocation6], %s235
          %s237 = sand.u32 %s31, 1
          %s238 = smul.addr %s237, 256
          %s239 = scalar_lea.vmem [#allocation5], %s238
          %241 = dma.done %s236, 4096
        $region24: #{tpu_custom_call.1} parent=19 // pred_fallthru
          _
      $region20: #{tpu_custom_call.1} parent=5 // pred_fallthru
        _
    $region6: #{tpu_custom_call.1} parent=1 // loop_footer
      %s23 = sadd.s32 1, %s19
    $region7: #{tpu_custom_call.1} parent=1 // loop_footer_branch
      %18 = sbr.rel target = $region3
    $region8: #{tpu_custom_call.1} parent=1 // loop_exit
      _
    %242 = vsyncpa [#allocation6], 1
    %s243 = scalar_lea.sflag [#allocation6], 1
    %244 = vsyncpa %s243, 1
  %245 = vsyncmov [#allocation2]
  %s246 = vpop.sfrf %245
  %p247 = scmp.eq.s32.totalorder %s246, 0
  %p248 = pneg %p247
  %250 = shalt.err (%p248)
  %s251 = scalar_lea.sflag [#allocation2], 1
  %252 = vsyncmov %s251
  %s253 = vpop.sfrf %252
  %p254 = scmp.eq.s32.totalorder %s253, 0
  %p255 = pneg %p254
  %257 = shalt.err (%p255)
  %s258 = scalar_lea.sflag [#allocation2], 2
  %259 = vsyncmov %s258
  %s260 = vpop.sfrf %259
  %p261 = scmp.eq.s32.totalorder %s260, 0
  %p262 = pneg %p261
  %264 = shalt.err (%p262)
  %s265 = scalar_lea.sflag [#allocation2], 3
  %266 = vsyncmov %s265
  %s267 = vpop.sfrf %266
  %p268 = scmp.eq.s32.totalorder %s267, 0
  %p269 = pneg %p268
  %271 = shalt.err (%p269)
  %s272 = scalar_lea.sflag [#allocation2], 4
  %273 = vsyncmov %s272
  %s274 = vpop.sfrf %273
  %p275 = scmp.eq.s32.totalorder %s274, 0
  %p276 = pneg %p275
  %278 = shalt.err (%p276)
  %s279 = scalar_lea.sflag [#allocation2], 5
  %280 = vsyncmov %s279
  %s281 = vpop.sfrf %280
  %p282 = scmp.eq.s32.totalorder %s281, 0
  %p283 = pneg %p282
  %285 = shalt.err (%p283)
  %s286 = scalar_lea.sflag [#allocation2], 6
  %287 = vsyncmov %s286
  %s288 = vpop.sfrf %287
  %p289 = scmp.eq.s32.totalorder %s288, 0
  %p290 = pneg %p289
  %292 = shalt.err (%p290)
  %s293 = scalar_lea.sflag [#allocation2], 7
  %294 = vsyncmov %s293
  %s295 = vpop.sfrf %294
  %p296 = scmp.eq.s32.totalorder %s295, 0
  %p297 = pneg %p296
  %299 = shalt.err (%p297)

</llo_original>
